<compile_context>
chip_gen: v7x
topology: tpu7x:2x2x1
jax: 0.10.0
libtpu: 0.0.40
codegen_flags: <defaults>
</compile_context>

<pallas_src>
import functools

import jax
import jax.numpy as jnp
from jax.experimental import pallas as pl
from jax.experimental.pallas import tpu as pltpu

LANES = 128
SUBLANES = 8


def _cdiv(a: int, b: int) -> int:
    return -(-a // b)


def _round_up(x: int, m: int) -> int:
    return ((x + m - 1) // m) * m


def _xplor_kernel(r_ref, o_ref, *, r_onset: float, r_cutoff: float):
    # Load in native dtype (f32/bf16/int...), compute in f32 in-register.
    r = r_ref[...].astype(jnp.float32)
    r2 = r * r

    r2_on = r_onset * r_onset
    r2_cut = r_cutoff * r_cutoff
    # Compile-time constant reciprocal: multiply instead of a vector divide.
    inv_denom = 1.0 / (r2_cut - r2_on) ** 3

    diff = r2_cut - r2
    smoothed = (diff * diff) * ((r2_cut + 2.0 * r2 - 3.0 * r2_on) * inv_denom)
    smoothed = jnp.where(r < r_cutoff, smoothed, 0.0)
    out = jnp.where(r < r_onset, 1.0, smoothed)

    o_ref[...] = out.astype(o_ref.dtype)


def xplor_cutoff_pallas(r, r_onset=3.5, r_cutoff=4.0, *, block_rows=4096):
    """XPLOR cutoff envelope, elementwise over r (any shape, any real dtype)."""
    assert float(r_onset) < float(r_cutoff), "r_onset must be < r_cutoff"

    orig_shape = r.shape
    in_dtype = r.dtype
    # Integer inputs: no wrapper-side convert pass; kernel casts in-register
    # and the result is float32 (matches torch promotion semantics).
    out_dtype = in_dtype if jnp.issubdtype(in_dtype, jnp.floating) else jnp.float32

    rf = r.reshape(-1)
    n = rf.shape[0]
    if n == 0:
        return jnp.zeros(orig_shape, dtype=out_dtype)

    # Lay out as a lane-dense (rows, 128) slab. Only pad when n is not a
    # multiple of 128 (minimal pad, <= 127 elements).
    rows = _cdiv(n, LANES)
    total = rows * LANES
    if total != n:
        rf = jnp.pad(rf, (0, total - n))
    r2d = rf.reshape(rows, LANES)

    # Block sizing: ~2 MiB per block for the widest of the in/out dtypes.
    in_item = jnp.dtype(in_dtype).itemsize
    out_item = jnp.dtype(out_dtype).itemsize
    io_item = max(in_item, out_item)
    br = int(block_rows) * max(1, 4 // io_item)
    # Don't exceed the array...
    br = min(br, _round_up(rows, SUBLANES))
    # ...and keep >= 2 grid steps when possible so v7x's two TensorCores can
    # both run (no effect on single-TC v5e/v6e beyond one extra tiny step).
    br = min(br, max(SUBLANES, _round_up(_cdiv(rows, 2), SUBLANES)))
    br = max(SUBLANES, _round_up(br, SUBLANES))

    # Ragged final block handled by Pallas boundary masking (elementwise op).
    grid = (_cdiv(rows, br),)

    kernel = functools.partial(
        _xplor_kernel, r_onset=float(r_onset), r_cutoff=float(r_cutoff)
    )

    cost = pl.CostEstimate(
        flops=10 * rows * LANES,
        transcendentals=0,
        bytes_accessed=rows * LANES * (in_item + out_item),
    )

    out2d = pl.pallas_call(
        kernel,
        out_shape=jax.ShapeDtypeStruct((rows, LANES), out_dtype),
        grid_spec=pltpu.PrefetchScalarGridSpec(
            num_scalar_prefetch=0,
            grid=grid,
            in_specs=[pl.BlockSpec((br, LANES), lambda i: (i, 0))],
            out_specs=pl.BlockSpec((br, LANES), lambda i: (i, 0)),
        ),
        compiler_params=pltpu.CompilerParams(
            dimension_semantics=("parallel",),
        ),
        cost_estimate=cost,
    )(r2d)

    if total != n:
        out = out2d.reshape(-1)[:n].reshape(orig_shape)
    else:
        out = out2d.reshape(orig_shape)
    return out


def xplor_cutoff_ref(r, r_onset=3.5, r_cutoff=4.0):
    """Pure-JAX reference mirroring the PyTorch implementation."""
    r = r.astype(jnp.float32)
    r2 = r ** 2
    r2_on = r_onset ** 2
    r2_cut = r_cutoff ** 2
    smoothed = jnp.where(
        r < r_cutoff,
        (r2_cut - r2) ** 2 * (r2_cut + 2 * r2 - 3 * r2_on) / (r2_cut - r2_on) ** 3,
        0.0,
    )
    return jnp.where(r < r_onset, 1.0, smoothed)


if __name__ == "__main__":
    key = jax.random.PRNGKey(0)
    k1, k2, k3 = jax.random.split(key, 3)

    # 1) Flat list of bond lengths, not lane-aligned (exercises the minimal
    #    pad + final slice path).
    r1 = jax.random.uniform(k1, (1000,), dtype=jnp.float32, minval=0.0, maxval=5.0)
    out1 = jax.block_until_ready(xplor_cutoff_pallas(r1, 3.5, 4.0))
    ref1 = xplor_cutoff_ref(r1, 3.5, 4.0)
    assert out1.shape == r1.shape and out1.dtype == r1.dtype
    assert jnp.allclose(out1, ref1, atol=1e-6, rtol=1e-6)

    # 2) 2-D non-aligned shape: rows=10, br=8 -> grid of 2 with a ragged final
    #    block, verifying Pallas boundary masking on-device.
    r2 = jax.random.uniform(k2, (4, 300), dtype=jnp.float32, minval=0.0, maxval=5.0)
    out2 = jax.block_until_ready(xplor_cutoff_pallas(r2, 3.5, 4.0))
    ref2 = xplor_cutoff_ref(r2, 3.5, 4.0)
    assert out2.shape == r2.shape and out2.dtype == r2.dtype
    assert jnp.allclose(out2, ref2, atol=1e-6, rtol=1e-6)

    # 3) Lane-aligned shape -> zero pad/slice traffic, multi-step grid.
    r3 = jax.random.uniform(k3, (16, 128), dtype=jnp.float32, minval=0.0, maxval=5.0)
    out3 = jax.block_until_ready(xplor_cutoff_pallas(r3, 3.5, 4.0))
    ref3 = xplor_cutoff_ref(r3, 3.5, 4.0)
    assert out3.shape == r3.shape and out3.dtype == r3.dtype
    assert jnp.allclose(out3, ref3, atol=1e-6, rtol=1e-6)

    # 4) Integer input -> float32 output with the cast done in-register.
    r4 = jnp.arange(8, dtype=jnp.int32).reshape(2, 4)
    out4 = jax.block_until_ready(xplor_cutoff_pallas(r4, 3.5, 4.0))
    ref4 = xplor_cutoff_ref(r4, 3.5, 4.0)
    assert out4.shape == r4.shape and out4.dtype == jnp.float32
    assert jnp.allclose(out4, ref4, atol=1e-6, rtol=1e-6)

    print("KERNEL_OK")
</pallas_src>

<mosaic_0001>
module attributes {stable_mosaic.version = 11 : i64} {
  func.func @_xplor_kernel(%arg0: i32, %arg1: memref<8x128xf32, #tpu.memory_space<vmem>>, %arg2: memref<8x128xf32, #tpu.memory_space<vmem>>) attributes {dimension_semantics = [#tpu.dimension_semantics<parallel>], iteration_bounds = array<i64: 1>, scalar_prefetch = 0 : i64, scratch_operands = 0 : i64, tpu.core_type = #tpu.core_type<tc>, window_params = [{transform_indices = @transform_0, window_bounds = array<i64: 8, 128>}, {transform_indices = @transform_1, window_bounds = array<i64: 8, 128>}]} {
    %c0 = arith.constant 0 : index
    %c0_0 = arith.constant 0 : index
    %0 = vector.load %arg1[%c0, %c0_0] : memref<8x128xf32, #tpu.memory_space<vmem>>, vector<8x128xf32>
    %1 = arith.mulf %0, %0 : vector<8x128xf32>
    %cst = arith.constant 1.600000e+01 : f32
    %2 = vector.broadcast %cst : f32 to vector<8x128xf32>
    %3 = arith.subf %2, %1 : vector<8x128xf32>
    %4 = arith.mulf %3, %3 : vector<8x128xf32>
    %cst_1 = arith.constant 2.000000e+00 : f32
    %5 = vector.broadcast %cst_1 : f32 to vector<8x128xf32>
    %6 = arith.mulf %5, %1 : vector<8x128xf32>
    %cst_2 = arith.constant 1.600000e+01 : f32
    %7 = vector.broadcast %cst_2 : f32 to vector<8x128xf32>
    %8 = arith.addf %7, %6 : vector<8x128xf32>
    %cst_3 = arith.constant 3.675000e+01 : f32
    %9 = vector.broadcast %cst_3 : f32 to vector<8x128xf32>
    %10 = arith.subf %8, %9 : vector<8x128xf32>
    %cst_4 = arith.constant 0.0189629626 : f32
    %11 = vector.broadcast %cst_4 : f32 to vector<8x128xf32>
    %12 = arith.mulf %10, %11 : vector<8x128xf32>
    %13 = arith.mulf %4, %12 : vector<8x128xf32>
    %cst_5 = arith.constant 4.000000e+00 : f32
    %14 = vector.broadcast %cst_5 : f32 to vector<8x128xf32>
    %15 = arith.cmpf olt, %0, %14 : vector<8x128xf32>
    %cst_6 = arith.constant 0.000000e+00 : f32
    %16 = vector.broadcast %cst_6 : f32 to vector<8x128xf32>
    %17 = arith.select %15, %13, %16 : vector<8x128xi1>, vector<8x128xf32>
    %cst_7 = arith.constant 3.500000e+00 : f32
    %18 = vector.broadcast %cst_7 : f32 to vector<8x128xf32>
    %19 = arith.cmpf olt, %0, %18 : vector<8x128xf32>
    %cst_8 = arith.constant 1.000000e+00 : f32
    %20 = vector.broadcast %cst_8 : f32 to vector<8x128xf32>
    %21 = arith.select %19, %20, %17 : vector<8x128xi1>, vector<8x128xf32>
    %c0_9 = arith.constant 0 : index
    %c0_10 = arith.constant 0 : index
    %22 = vector.load %arg2[%c0_9, %c0_10] : memref<8x128xf32, #tpu.memory_space<vmem>>, vector<8x128xf32>
    tpu.vector_store %arg2[%c0_9, %c0_10], %21 {strides = array<i32>} : memref<8x128xf32, #tpu.memory_space<vmem>>, vector<8x128xf32>,
    return
  }
  func.func @transform_0(%arg0: i32) -> (i32, i32) {
    %c0_i32 = arith.constant 0 : i32
    %c0_i32_0 = arith.constant 0 : i32
    return %arg0, %c0_i32 : i32, i32
  }
  func.func @transform_1(%arg0: i32) -> (i32, i32) {
    %c0_i32 = arith.constant 0 : i32
    %c0_i32_0 = arith.constant 0 : i32
    return %arg0, %c0_i32 : i32, i32
  }
}

</mosaic_0001>

<llo_original>
// kernel: tpu_custom_call.1
$region0: #{tpu_custom_call.1}
  #allocation0 [shape = 'u32[]', space=smem, size = 0x4, offset = 0x4, fixed_abs, tag = 'smem constant byte address 0x4 - core index']
  #allocation1 [shape = 'u32[144,128]{1,0:T(1,128)}', space=vmem, size = 0x12000, scoped, tag = 'internal scratch']
  %s0 = inlined_call_operand.hbm [shape: f32[8,128], index: 0, kind: input, shape index: {}]
  %s1 = inlined_call_operand.hbm [shape: f32[8,128], index: 1, kind: output, shape index: {}]
  %s2 = sld [smem:[#allocation0]]
  $region18: #{tpu_custom_call.1} parent=0
    _
  %s4 = ssub.s32 1, %s2
  %s5 = scalar_select 0, %s4, %s2
  $region1: #{tpu_custom_call.1} parent=0
    #allocation2 [shape = 'u8[4096]{0}', space=vmem, size = 0x1000, scoped, tag = 'input window, operand 0, single buffered']
    #allocation3 [shape = 's32[1]{0}', space=sflag, size = 0x4, scoped, tag = 'scoped memory for tpu_custom_call.1']
    #allocation4 [shape = 's32[1]{0}', space=sflag, size = 0x4, scoped, tag = 'scoped memory for tpu_custom_call.1']
    #allocation5 [shape = 'u8[4096]{0}', space=vmem, size = 0x1000, scoped, tag = 'output window, operand 0, single buffered']
    %6 = vsyncpa [#allocation3], 0
    %7 = vsyncpa [#allocation4], 0
    // Predicated region
    $region2: #{tpu_custom_call.1} parent=1 // pred_check
      _
    $region3: #{tpu_custom_call.1} parent=1 // pred_check_branch
      %9 = sbr.rel (0) target = $region5
    $region4: #{tpu_custom_call.1} parent=1 // pred_region
      %s11 = ssub.s32 128, 128
      %12 = vsyncadd [#allocation3], %s11
      %s14 = sshll.u32 [#allocation2], 4
      %s15 = int_to_ptr.vmem [resolvable:$true] %s14
      %17 = dma.hbm_to_vmem [thread:$0]  %s0, 128, %s15, [#allocation3]
    $region5: #{tpu_custom_call.1} parent=1 // pred_fallthru
      _
    // Predicated region
    $region6: #{tpu_custom_call.1} parent=1 // pred_check
      _
    $region7: #{tpu_custom_call.1} parent=1 // pred_check_branch
      %19 = sbr.rel (0) target = $region9
    $region8: #{tpu_custom_call.1} parent=1 // pred_region
      %20 = dma.done [#allocation3], 128
    $region9: #{tpu_custom_call.1} parent=1 // pred_fallthru
      _
    %v21 = vld [vmem:[#allocation2] sm:$0xff]
    %v22 = vmul.f32 %v21, %v21
    %v23 = vsub.f32 16.0, %v22
    %v24 = vmul.f32 %v23, %v23
    %v25 = vmul.f32 %v22, 2.0
    %v26 = vadd.f32 %v25, 16.0
    %v27 = vsub.f32 %v26, 36.75
    %v28 = vmul.f32 %v27, 0.018962963
    %v29 = vmul.f32 %v24, %v28
    %vm30 = vcmp.lt.f32.partialorder %v21, 4.0
    %v31 = vsel %vm30, %v29, 0.0
    %vm32 = vcmp.lt.f32.partialorder %v21, 3.5
    %v33 = vsel %vm32, 1.0, %v31
    %34 = vst [vmem:[#allocation5] sm:$0xff] %v33
    // Predicated region
    $region10: #{tpu_custom_call.1} parent=1 // pred_check
      _
    $region11: #{tpu_custom_call.1} parent=1 // pred_check_branch
      %36 = sbr.rel (0) target = $region13
    $region12: #{tpu_custom_call.1} parent=1 // pred_region
      %s38 = ssub.s32 128, 128
      %39 = vsyncadd [#allocation4], %s38
      %s41 = sshll.u32 [#allocation5], 4
      %s42 = int_to_ptr.vmem [resolvable:$true] %s41
      %44 = dma.vmem_to_hbm [thread:$0]  %s42, 128, %s1, [#allocation4]
    $region13: #{tpu_custom_call.1} parent=1 // pred_fallthru
      _
    // Predicated region
    $region14: #{tpu_custom_call.1} parent=1 // pred_check
      _
    $region15: #{tpu_custom_call.1} parent=1 // pred_check_branch
      %46 = sbr.rel (0) target = $region17
    $region16: #{tpu_custom_call.1} parent=1 // pred_region
      %47 = dma.done [#allocation4], 128
    $region17: #{tpu_custom_call.1} parent=1 // pred_fallthru
      _
    %48 = vsyncpa [#allocation3], 1
    %49 = vsyncpa [#allocation4], 1

</llo_original>
